<compile_context>
chip_gen: v6e
topology: v6e:2x2x1
jax: 0.10.0
libtpu: 0.0.40
codegen_flags: <defaults>
</compile_context>

<pallas_src>
import functools

import jax
import jax.numpy as jnp
from jax.experimental import pallas as pl
from jax.experimental.pallas import tpu as pltpu


# ---------------------------------------------------------------------------
# Kernels
# ---------------------------------------------------------------------------

def _resident_kernel(emb_ref, paths_ref, out_ref):
    """Small shapes: paths + embedding fully resident in VMEM; P-loop inside the kernel."""
    out_ref[...] = emb_ref[...]
    n_paths = paths_ref.shape[0]

    @pl.loop(0, n_paths)
    def _(p):
        a = paths_ref[p]                                        # (N, N), original dtype
        e = out_ref[...]                                        # (N, Dp) f32 carry
        upd = jnp.dot(a.astype(jnp.bfloat16), e.astype(jnp.bfloat16),
                      preferred_element_type=jnp.float32)
        rs = jnp.sum(a.astype(jnp.float32), axis=-1, keepdims=True)
        out_ref[...] = (e + upd) * (1.0 / (rs + 1.0))


def _stream_full_kernel(emb_hbm, path_ref, out_ref):
    """grid=(P,): one full (N, N) path block per step; out_ref carries the embedding."""
    p = pl.program_id(0)

    @pl.when(p == 0)
    def _():
        pltpu.sync_copy(emb_hbm, out_ref)                       # one-shot HBM -> VMEM init

    a = path_ref[0]                                             # (N, N), original dtype
    e = out_ref[...]                                            # single f32 load, reused
    upd = jnp.dot(a.astype(jnp.bfloat16), e.astype(jnp.bfloat16),
                  preferred_element_type=jnp.float32)
    rs = jnp.sum(a.astype(jnp.float32), axis=-1, keepdims=True)
    out_ref[...] = (e + upd) * (1.0 / (rs + 1.0))


def _stream_tiled_kernel(emb_hbm, path_ref, out_ref, rs_ref, ebf_ref):
    """grid=(P, nk): K-tiled path stream. A@e is accumulated directly into out_ref (which
    already holds the previous embedding, so no separate accumulator and no extra add);
    ebf_ref is a bf16 shadow of the previous embedding (MXU RHS), refreshed per path."""
    p = pl.program_id(0)
    k = pl.program_id(1)
    nk = pl.num_programs(1)

    @pl.when(jnp.logical_and(p == 0, k == 0))
    def _():
        pltpu.sync_copy(emb_hbm, out_ref)
        ebf_ref[...] = out_ref[...].astype(jnp.bfloat16)

    @pl.when(k == 0)
    def _():
        rs_ref[...] = jnp.zeros_like(rs_ref)

    tk = path_ref.shape[-1]
    start = pl.multiple_of(k * tk, tk)
    a = path_ref[0]                                             # (N, tk), original dtype
    e_k = ebf_ref[pl.ds(start, tk), :]                          # (tk, Dp) prev emb, bf16
    out_ref[...] += jnp.dot(a.astype(jnp.bfloat16), e_k,
                            preferred_element_type=jnp.float32)
    rs_ref[...] += jnp.sum(a.astype(jnp.float32), axis=-1, keepdims=True)

    @pl.when(k == nk - 1)
    def _():
        new = out_ref[...] * (1.0 / (rs_ref[...] + 1.0))
        out_ref[...] = new
        ebf_ref[...] = new.astype(jnp.bfloat16)


# ---------------------------------------------------------------------------
# Wrapper
# ---------------------------------------------------------------------------

def _round_up(x, m):
    return (x + m - 1) // m * m


def _usable_vmem_bytes(frac=0.85):
    cap = 64 << 20                        # conservative default = v7x physical VMEM per TC
    try:
        info = pltpu.get_tpu_info()
        cap = int(getattr(info, "vmem_capacity_bytes", cap))
    except Exception:
        pass
    return int(cap * frac)


def _choose_block_k(n, elem_bytes, budget_bytes, n_buffers, block_k=None):
    """Path-matrix column tile: full N unless the buffered block exceeds the budget."""
    if block_k is not None:
        tk = int(block_k)
        assert tk == n or (tk % 128 == 0 and n % tk == 0), "invalid block_k"
        return tk
    if n_buffers * n * n * elem_bytes <= budget_bytes or n % 128 != 0:
        return n
    max_cols = max(128, (budget_bytes // (n_buffers * elem_bytes * n)) // 128 * 128)
    tk = 128
    c = 256
    while c <= max_cols:
        if n % c == 0:
            tk = c
        c += 128
    return tk


@functools.partial(jax.jit, static_argnames=("block_k", "path_buffers", "force_stream"))
def bottom_to_up_mean(embedding, bottom_to_top_paths, block_k=None, path_buffers=2,
                      force_stream=False):
    """embedding: (N, D); bottom_to_top_paths: (P, N, N), any numeric dtype (0/1 masks may
    be int8/uint8 to halve HBM traffic). Returns (N, D) in embedding.dtype."""
    emb = jnp.asarray(embedding)
    paths = jnp.asarray(bottom_to_top_paths)
    N, D = emb.shape
    P = paths.shape[0]
    if P == 0:
        return emb
    out_dtype = emb.dtype

    # Lane-dense feature dim (multiple of 128); zero padding is inert under the recurrence.
    D_pad = max(128, _round_up(D, 128))
    emb_f32 = emb.astype(jnp.float32)
    if D_pad != D:
        emb_f32 = jnp.pad(emb_f32, ((0, 0), (0, D_pad - D)))

    usable = _usable_vmem_bytes()
    elem = paths.dtype.itemsize
    n_buf = max(2, int(path_buffers))

    # ---- small shapes: fully resident kernel, P-loop inside the kernel ------------------
    resident_need = P * N * N * elem + 2 * N * D_pad * 4 + (1 << 20)
    if (not force_stream) and block_k is None and resident_need <= min(usable, 24 << 20):
        out = pl.pallas_call(
            _resident_kernel,
            out_shape=jax.ShapeDtypeStruct((N, D_pad), jnp.float32),
            in_specs=[pl.BlockSpec(memory_space=pltpu.MemorySpace.VMEM),
                      pl.BlockSpec(memory_space=pltpu.MemorySpace.VMEM)],
            out_specs=pl.BlockSpec(memory_space=pltpu.MemorySpace.VMEM),
            compiler_params=pltpu.CompilerParams(
                vmem_limit_bytes=int(min(max(2 * resident_need, 16 << 20), usable))),
        )(emb_f32, paths)
        out = out[:, :D] if D_pad != D else out
        return out.astype(out_dtype)

    # ---- streaming kernel ----------------------------------------------------------------
    # Non-path resident VMEM: out block (+ slack), bf16 shadow, row-sum scratch.
    non_path = 2 * N * D_pad * 4 + N * D_pad * 2 + N * 512
    path_budget = max(usable - non_path - (2 << 20), 4 << 20)

    Np, paths_in, emb_in = N, paths, emb_f32
    if block_k is None and n_buf * N * N * elem > path_budget and N % 128 != 0:
        # K-tiling needed but N is irregular: pad N (zero rows/cols are inert).
        Np = _round_up(N, 128)
        paths_in = jnp.pad(paths, ((0, 0), (0, Np - N), (0, Np - N)))
        emb_in = jnp.pad(emb_f32, ((0, Np - N), (0, 0)))

    tk = _choose_block_k(Np, elem, path_budget, n_buf, block_k)
    nk = Np // tk

    need = (n_buf * Np * tk * elem + 2 * Np * D_pad * 4 + (2 << 20)
            + (Np * D_pad * 2 + Np * 512 if nk > 1 else 0))
    vmem_limit = int(min(max(need, 16 << 20), usable))

    path_kwargs = {}
    if n_buf > 2:                          # deeper pipelining once VMEM headroom exists
        path_kwargs = dict(pipeline_mode=pl.Buffered(n_buf))

    if nk == 1:
        grid_spec = pltpu.PrefetchScalarGridSpec(
            num_scalar_prefetch=0,
            grid=(P,),
            in_specs=[pl.BlockSpec(memory_space=pl.ANY),
                      pl.BlockSpec((1, Np, Np), lambda p: (p, 0, 0), **path_kwargs)],
            out_specs=pl.BlockSpec((Np, D_pad), lambda p: (0, 0)),
        )
        kernel, dims = _stream_full_kernel, ("arbitrary",)
    else:
        grid_spec = pltpu.PrefetchScalarGridSpec(
            num_scalar_prefetch=0,
            grid=(P, nk),
            in_specs=[pl.BlockSpec(memory_space=pl.ANY),
                      pl.BlockSpec((1, Np, tk), lambda p, k: (p, 0, k), **path_kwargs)],
            out_specs=pl.BlockSpec((Np, D_pad), lambda p, k: (0, 0)),
            scratch_shapes=[pltpu.VMEM((Np, 1), jnp.float32),        # row-sum accumulator
                            pltpu.VMEM((Np, D_pad), jnp.bfloat16)],  # prev-emb bf16 shadow
        )
        kernel, dims = _stream_tiled_kernel, ("arbitrary", "arbitrary")

    out = pl.pallas_call(
        kernel,
        out_shape=jax.ShapeDtypeStruct((Np, D_pad), jnp.float32),
        grid_spec=grid_spec,
        compiler_params=pltpu.CompilerParams(
            dimension_semantics=dims, vmem_limit_bytes=vmem_limit),
    )(emb_in, paths_in)

    if Np != N or D_pad != D:
        out = out[:N, :D]
    return out.astype(out_dtype)


# ---------------------------------------------------------------------------
# Reference + self-test
# ---------------------------------------------------------------------------

def _reference(embedding, paths):
    emb = embedding.astype(jnp.float32)
    for i in range(paths.shape[0]):
        A = paths[i].astype(jnp.float32)
        emb = emb + A @ emb
        emb = emb * (1.0 / (A.sum(-1) + 1.0))[:, None]
    return emb


if __name__ == "__main__":
    key = jax.random.PRNGKey(0)
    k1, k2, k3, k4 = jax.random.split(key, 4)

    # --- primary check: module-implied small shapes (resident kernel) ---
    N, D, P = 16, 32, 3
    embedding = jax.random.normal(k1, (N, D), dtype=jnp.float32)
    paths = (jax.random.uniform(k2, (P, N, N)) > 0.7).astype(jnp.float32)
    out = jax.block_until_ready(bottom_to_up_mean(embedding, paths))
    ref = _reference(embedding, paths)
    assert out.shape == ref.shape
    assert jnp.allclose(out, ref, atol=3e-2, rtol=3e-2), "mismatch vs reference (resident)"

    # --- streaming kernel, full-N path block (nk == 1) ---
    N2, D2, P2 = 256, 40, 2
    emb2 = jax.random.normal(k3, (N2, D2), dtype=jnp.float32)
    paths2 = (jax.random.uniform(k4, (P2, N2, N2)) > 0.7).astype(jnp.float32)
    out2 = jax.block_until_ready(bottom_to_up_mean(emb2, paths2, force_stream=True))
    ref2 = _reference(emb2, paths2)
    assert jnp.allclose(out2, ref2, atol=3e-2, rtol=3e-2), "mismatch vs reference (stream)"

    # --- streaming kernel, K-tiled path block (nk > 1) ---
    out3 = jax.block_until_ready(bottom_to_up_mean(emb2, paths2, block_k=128))
    assert jnp.allclose(out3, ref2, atol=3e-2, rtol=3e-2), "mismatch vs reference (tiled)"

    print("KERNEL_OK")
</pallas_src>

<mosaic_0001>
module attributes {stable_mosaic.version = 11 : i64} {
  func.func @_resident_kernel(%arg0: memref<16x128xf32, #tpu.memory_space<vmem>>, %arg1: memref<3x16x16xf32, #tpu.memory_space<vmem>>, %arg2: memref<16x128xf32, #tpu.memory_space<vmem>>) attributes {dimension_semantics = [], scalar_prefetch = 0 : i64, scratch_operands = 0 : i64, tpu.core_type = #tpu.core_type<tc>} {
    %c0 = arith.constant 0 : index
    %c0_0 = arith.constant 0 : index
    %0 = vector.load %arg0[%c0, %c0_0] : memref<16x128xf32, #tpu.memory_space<vmem>>, vector<16x128xf32>
    %c0_1 = arith.constant 0 : index
    %c0_2 = arith.constant 0 : index
    %1 = vector.load %arg2[%c0_1, %c0_2] : memref<16x128xf32, #tpu.memory_space<vmem>>, vector<16x128xf32>
    tpu.vector_store %arg2[%c0_1, %c0_2], %0 {strides = array<i32>} : memref<16x128xf32, #tpu.memory_space<vmem>>, vector<16x128xf32>,
    %c0_i32 = arith.constant 0 : i32
    %c3_i32 = arith.constant 3 : i32
    %2 = arith.addi %c0_i32, %c3_i32 : i32
    %c1_i32 = arith.constant 1 : i32
    scf.for %arg3 = %c0_i32 to %2 step %c1_i32  : i32 {
      %c1_i32_4 = arith.constant 1 : i32
      %3 = arith.muli %arg3, %c1_i32_4 : i32
      %c0_i32_5 = arith.constant 0 : i32
      %4 = arith.addi %c0_i32_5, %3 : i32
      %5 = arith.index_cast %4 : i32 to index
      %c0_6 = arith.constant 0 : index
      %c0_7 = arith.constant 0 : index
      %6 = vector.load %arg1[%5, %c0_6, %c0_7] : memref<3x16x16xf32, #tpu.memory_space<vmem>>, vector<1x16x16xf32>
      %7 = vector.shape_cast %6 : vector<1x16x16xf32> to vector<16x16xf32>
      %c0_8 = arith.constant 0 : index
      %c0_9 = arith.constant 0 : index
      %8 = vector.load %arg2[%c0_8, %c0_9] : memref<16x128xf32, #tpu.memory_space<vmem>>, vector<16x128xf32>
      %9 = arith.truncf %7 : vector<16x16xf32> to vector<16x16xbf16>
      %10 = arith.truncf %8 : vector<16x128xf32> to vector<16x128xbf16>
      %cst = arith.constant dense<0.000000e+00> : vector<16x128xf32>
      %11 = tpu.matmul %9, %10, %cst {dimension_numbers = #tpu.dot_dimension_numbers<[1], [0], [0], [1], [0, 0, 1, 1], [], []>} : vector<16x16xbf16>, vector<16x128xbf16>, vector<16x128xf32> -> vector<16x128xf32>
      %cst_10 = arith.constant dense<0.000000e+00> : vector<16xf32>
      %12 = vector.multi_reduction <add>, %7, %cst_10 [1] : vector<16x16xf32> to vector<16xf32>
      %13 = vector.shape_cast %12 : vector<16xf32> to vector<16x1xf32>
      %14 = arith.addf %8, %11 : vector<16x128xf32>
      %cst_11 = arith.constant 1.000000e+00 : f32
      %15 = vector.broadcast %cst_11 : f32 to vector<16x1xf32>
      %16 = arith.addf %13, %15 : vector<16x1xf32>
      %cst_12 = arith.constant 1.000000e+00 : f32
      %17 = vector.broadcast %cst_12 : f32 to vector<16x1xf32>
      %18 = arith.divf %17, %16 : vector<16x1xf32>
      %19 = vector.broadcast %18 : vector<16x1xf32> to vector<16x128xf32>
      %20 = arith.mulf %14, %19 : vector<16x128xf32>
      %c0_13 = arith.constant 0 : index
      %c0_14 = arith.constant 0 : index
      %21 = vector.load %arg2[%c0_13, %c0_14] : memref<16x128xf32, #tpu.memory_space<vmem>>, vector<16x128xf32>
      tpu.vector_store %arg2[%c0_13, %c0_14], %20 {strides = array<i32>} : memref<16x128xf32, #tpu.memory_space<vmem>>, vector<16x128xf32>,
    }
    %c3_i32_3 = arith.constant 3 : i32
    return
  }
}

</mosaic_0001>

<llo_original>
// kernel: bottom_to_up_mean.1
$region0: #{bottom_to_up_mean.1}
  #allocation0 [shape = 'u32[]', space=smem, size = 0x4, offset = 0x4, fixed_abs, tag = 'smem constant byte address 0x4 - core index']
  #allocation1 [shape = 'u32[144,128]{1,0:T(1,128)}', space=vmem, size = 0x12000, scoped, tag = 'internal scratch']
  %s0 = inlined_call_operand.vmem [shape: f32[16,128], index: 0, kind: input, shape index: {}]
  %s1 = inlined_call_operand.hbm [shape: f32[3,16,16], index: 1, kind: input, shape index: {}]
  %s2 = inlined_call_operand.hbm [shape: f32[16,128], index: 2, kind: output, shape index: {}]
  %s3 = sld [smem:[#allocation0]]
  $region29: #{bottom_to_up_mean.1} parent=0
    _
  %s5 = ssub.s32 1, %s3
  %s6 = scalar_select 0, %s5, %s3
  $region1: #{bottom_to_up_mean.1} parent=0
    #allocation2 [shape = 'u8[24576]{0}', space=vmem, size = 0x6000, scoped, tag = 'input window, operand 1, single buffered']
    #allocation3 [shape = 's32[1]{0}', space=sflag, size = 0x4, scoped, tag = 'scoped memory for bottom_to_up_mean.1']
    #allocation4 [shape = 's32[1]{0}', space=sflag, size = 0x4, scoped, tag = 'scoped memory for bottom_to_up_mean.1']
    #allocation5 [shape = 'u8[8192]{0}', space=vmem, size = 0x2000, scoped, tag = 'output window, operand 0, single buffered']
    %7 = vsyncpa [#allocation3], 0
    %8 = vsyncpa [#allocation4], 0
    // Predicated region
    $region2: #{bottom_to_up_mean.1} parent=1 // pred_check
      _
    $region3: #{bottom_to_up_mean.1} parent=1 // pred_check_branch
      %10 = sbr.rel (0) target = $region5
    $region4: #{bottom_to_up_mean.1} parent=1 // pred_region
      _
    $region5: #{bottom_to_up_mean.1} parent=1 // pred_fallthru
      _
    // Predicated region
    $region6: #{bottom_to_up_mean.1} parent=1 // pred_check
      _
    $region7: #{bottom_to_up_mean.1} parent=1 // pred_check_branch
      %12 = sbr.rel (0) target = $region9
    $region8: #{bottom_to_up_mean.1} parent=1 // pred_region
      %s14 = ssub.s32 768, 768
      %15 = vsyncadd [#allocation3], %s14
      %s16 = sshll.u32 [#allocation2], 4
      %s17 = int_to_ptr.vmem [resolvable:$true] %s16
      %22 = dma.hbm_to_vmem [thread:$0]  %s1, 768, %s17, [#allocation3], 128, 128, 8
    $region9: #{bottom_to_up_mean.1} parent=1 // pred_fallthru
      _
    // Predicated region
    $region10: #{bottom_to_up_mean.1} parent=1 // pred_check
      _
    $region11: #{bottom_to_up_mean.1} parent=1 // pred_check_branch
      %24 = sbr.rel (0) target = $region13
    $region12: #{bottom_to_up_mean.1} parent=1 // pred_region
      %25 = dma.done [#allocation3], 768
    $region13: #{bottom_to_up_mean.1} parent=1 // pred_fallthru
      _
    %v27 = vld [vmem:[%s0] sm:$0xff]
    %v28 = vld [vmem:[%s0 + $0x8] sm:$0xff]
    %29 = vst [vmem:[#allocation5] sm:$0xff] %v27
    %30 = vst [vmem:[#allocation5 + $0x8] sm:$0xff] %v28
    loop: start=0, step=1, limit=3
    $region14: #{bottom_to_up_mean.1} parent=1 // loop_pre_header
      _
    $region15: #{bottom_to_up_mean.1} parent=1 // loop_header
      %s32 = sphi 0, %s36
      %p33 = scmp.ge.s32.totalorder %s32, 3
    $region16: #{bottom_to_up_mean.1} parent=1 // loop_header_branch
      %35 = sbr.rel (%p33) target = $region20
    $region17: #{bottom_to_up_mean.1} parent=1 // loop_body
      %s37 = smul.u32 %s32, 16
      %s38 = scalar_lea.vmem [#allocation2], %s37
      %v39 = vld [vmem:[%s38] sm:$0xff]
      %v40 = vld [vmem:[%s38 + $0x8] sm:$0xff]
      %v41 = vld [vmem:[#allocation5] sm:$0xff]
      %v42 = vld [vmem:[#allocation5 + $0x8] sm:$0xff]
      %v43 = vpack.c.bf16 %v40, %v39
      %v44 = vpack.c.bf16 %v42, %v41
      %vm45 = vcmask 130048
      %v47 = vsel %vm45, %v43, 0
      %49 = vmatprep.subr.bf16.mxu0 0
      %50 = vmatpush1.bf16.msra.mxu0 0
      %51 = vmatprep.subr.bf16.mxu0 0
      %52 = vmatpush1.bf16.msra.mxu0 0
      %53 = vmatprep.subr.bf16.mxu0 0
      %54 = vmatpush1.bf16.msra.mxu0 0
      %55 = vmatprep.subr.bf16.mxu0 0
      %56 = vmatpush1.bf16.msra.mxu0 0
      %57 = vmatprep.subr.bf16.mxu0 0
      %58 = vmatpush1.bf16.msra.mxu0 0
      %59 = vmatprep.subr.bf16.mxu0 0
      %60 = vmatpush1.bf16.msra.mxu0 0
      %61 = vmatprep.subr.bf16.mxu0 0
      %62 = vmatpush1.bf16.msra.mxu0 0
      %63 = vmatprep.subr.bf16.mxu0 0
      %64 = vmatpush1.bf16.msra.mxu0 %v44
      %65 = vmatprep.subr.bf16.mxu0 0
      %66 = vmatpush2.bf16.msra.mxu0 0
      %67 = vmatprep.subr.bf16.mxu0 0
      %68 = vmatpush2.bf16.msra.mxu0 0
      %69 = vmatprep.subr.bf16.mxu0 0
      %70 = vmatpush2.bf16.msra.mxu0 0
      %71 = vmatprep.subr.bf16.mxu0 0
      %72 = vmatpush2.bf16.msra.mxu0 0
      %73 = vmatprep.subr.bf16.mxu0 0
      %74 = vmatpush2.bf16.msra.mxu0 0
      %75 = vmatprep.subr.bf16.mxu0 0
      %76 = vmatpush2.bf16.msra.mxu0 0
      %77 = vmatprep.subr.bf16.mxu0 0
      %78 = vmatpush2.bf16.msra.mxu0 0
      %79 = vmatprep.subr.bf16.mxu0 0
      %80 = vmatpush2.bf16.msra.mxu0 0
      %81 = vmatprep.mubr.bf16.mxu0 0
      %82 = vmatmul.mubr.bf16.gmra.mxu0 %v47
      %v83 = vpop.f32.mrf.mxu0
      %v84 = vadd.f32 0.0, %v83
      %v85 = vpop.f32.mrf.mxu0
      %v86 = vpop.f32.mrf.mxu0
      %v87 = vadd.f32 0.0, %v86
      %v88 = vpop.f32.mrf.mxu0
      %89 = vdwg.mxu0
      %v90 = vsel %vm45, %v39, 0.0
      %91 = vadd.xlane.f32.xlu0 %v90
      %v92 = vpop.xlane.xlu0 %91
      %v93 = vsel %vm45, %v40, 0.0
      %94 = vadd.xlane.f32.xlu0 %v93
      %v95 = vpop.xlane.xlu0 %94
      %v96 = vadd.f32 %v41, %v84
      %v97 = vadd.f32 %v42, %v87
      %v98 = vadd.f32 %v92, 1.0
      %v99 = vadd.f32 %v95, 1.0
      %v100 = vrcp.pop %v98
      %v101 = vmul.f32 1.0, %v100
      %v102 = vrcp.pop %v99
      %v103 = vmul.f32 1.0, %v102
      %v104 = vmul.f32 %v96, %v101
      %v105 = vmul.f32 %v97, %v103
      %106 = vst [vmem:[#allocation5] sm:$0xff] %v104
      %107 = vst [vmem:[#allocation5 + $0x8] sm:$0xff] %v105
    $region18: #{bottom_to_up_mean.1} parent=1 // loop_footer
      %s36 = sadd.s32 1, %s32
    $region19: #{bottom_to_up_mean.1} parent=1 // loop_footer_branch
      %31 = sbr.rel target = $region15
    $region20: #{bottom_to_up_mean.1} parent=1 // loop_exit
      _
    // Predicated region
    $region21: #{bottom_to_up_mean.1} parent=1 // pred_check
      _
    $region22: #{bottom_to_up_mean.1} parent=1 // pred_check_branch
      %109 = sbr.rel (0) target = $region24
    $region23: #{bottom_to_up_mean.1} parent=1 // pred_region
      %s111 = ssub.s32 256, 256
      %112 = vsyncadd [#allocation4], %s111
      %s113 = sshll.u32 [#allocation5], 4
      %s114 = int_to_ptr.vmem [resolvable:$true] %s113
      %119 = dma.vmem_to_hbm [thread:$0]  %s114, 256, %s2, [#allocation4], 128, 128, 8
    $region24: #{bottom_to_up_mean.1} parent=1 // pred_fallthru
      _
    // Predicated region
    $region25: #{bottom_to_up_mean.1} parent=1 // pred_check
      _
    $region26: #{bottom_to_up_mean.1} parent=1 // pred_check_branch
      %121 = sbr.rel (0) target = $region28
    $region27: #{bottom_to_up_mean.1} parent=1 // pred_region
      %122 = dma.done [#allocation4], 256
    $region28: #{bottom_to_up_mean.1} parent=1 // pred_fallthru
      _
    %123 = vsyncpa [#allocation3], 1
    %124 = vsyncpa [#allocation4], 1

</llo_original>
